<compile_context>
chip_gen: v6e
topology: v6e:2x2x1
jax: 0.10.0
libtpu: 0.0.40
codegen_flags: <defaults>
</compile_context>

<pallas_src>
import jax
import jax.numpy as jnp
from jax.experimental import pallas as pl
from jax.experimental.pallas import tpu as pltpu

NUM_CLASSES = 2
MAX_TILE_B = 256  # batch tile when B is large (multiple of 8, fits VMEM easily)


def _head_softmax_kernel(x_ref, w1_ref, b1_ref, w2_ref, b2_ref, w3d_ref, b3d_ref,
                         prob_ref):
    # x_ref: [TILE_B, H] bf16 CLS-token features (sliced + cast in the wrapper).
    x = x_ref[...]

    # dense: H -> H, tanh  (bf16 MXU matmul, f32 accumulation, f32 bias; tanh on EUP)
    h1 = jnp.tanh(
        jnp.dot(x, w1_ref[...], preferred_element_type=jnp.float32) + b1_ref[...])

    # dense2: H -> H//2, tanh
    h2 = jnp.tanh(
        jnp.dot(h1.astype(jnp.bfloat16), w2_ref[...],
                preferred_element_type=jnp.float32) + b2_ref[...])

    # out_proj folded to the 2-class logit difference d = l1 - l0 (f32, tiny).
    d = jnp.dot(h2, w3d_ref[...], preferred_element_type=jnp.float32) + b3d_ref[...]

    # softmax over 2 classes == [1 - sigmoid(d), sigmoid(d)]  (no XLU reduction)
    p1 = jax.nn.sigmoid(d)                                    # [TILE_B, 1]
    col = jax.lax.broadcasted_iota(jnp.int32, prob_ref.shape, 1)
    prob_ref[...] = jnp.where(col == 1, p1, 1.0 - p1).astype(prob_ref.dtype)


def prepare_head_params(w1, b1, w2, b2, w3, b3):
    """One-time parameter prep (call at load time, NOT per forward pass).

    PyTorch Linear weights are [out, in]; transpose to [in, out] so the kernel
    does plain x @ W.  The two big weights are cast to bf16 for the MXU; the
    out_proj is pre-folded into the 2-class logit-difference vector."""
    H = w1.shape[1]
    L2 = w2.shape[0]
    w3t = jnp.asarray(w3, jnp.float32).T                        # [L2, 2]
    return {
        "w1": jnp.asarray(w1, jnp.float32).T.astype(jnp.bfloat16),   # [H, H]
        "b1": jnp.asarray(b1, jnp.float32).reshape(1, H),
        "w2": jnp.asarray(w2, jnp.float32).T.astype(jnp.bfloat16),   # [H, L2]
        "b2": jnp.asarray(b2, jnp.float32).reshape(1, L2),
        "w3d": (w3t[:, 1] - w3t[:, 0]).reshape(L2, 1),               # [L2, 1]
        "b3d": jnp.asarray(b3[1] - b3[0], jnp.float32).reshape(1, 1),
    }


def roberta_head_softmax(features, params):
    """features: [B, S, H] encoder output.  Returns softmax probs [B, 2]."""
    B, _, H = features.shape
    L2 = params["w2"].shape[1]

    # Slice the CLS token BEFORE the pallas_call and cast to bf16: only B*H
    # bf16 elements ever reach the kernel (instead of B*S*H f32).
    cls = features[:, 0, :].astype(jnp.bfloat16)                # [B, H]

    # Batch tiling: single program for small B, grid over B for large B.
    tile_b = B if B <= MAX_TILE_B else MAX_TILE_B
    pad = (-B) % tile_b
    if pad:
        cls = jnp.pad(cls, ((0, pad), (0, 0)))
    bp = B + pad
    grid = (bp // tile_b,)

    const = lambda i: (0, 0)  # weights resident across the batch grid

    out = pl.pallas_call(
        _head_softmax_kernel,
        out_shape=jax.ShapeDtypeStruct((bp, NUM_CLASSES), jnp.float32),
        grid=grid,
        in_specs=[
            pl.BlockSpec((tile_b, H), lambda i: (i, 0)),        # CLS features (bf16)
            pl.BlockSpec((H, H), const),                        # w1 (bf16)
            pl.BlockSpec((1, H), const),                        # b1 (f32)
            pl.BlockSpec((H, L2), const),                       # w2 (bf16)
            pl.BlockSpec((1, L2), const),                       # b2 (f32)
            pl.BlockSpec((L2, 1), const),                       # w3 diff (f32)
            pl.BlockSpec((1, 1), const),                        # b3 diff (f32)
        ],
        out_specs=pl.BlockSpec((tile_b, NUM_CLASSES), lambda i: (i, 0)),
        compiler_params=pltpu.CompilerParams(
            dimension_semantics=("parallel",)),
    )(cls, params["w1"], params["b1"], params["w2"], params["b2"],
      params["w3d"], params["b3d"])
    return out[:B]


def reference(features, w1, b1, w2, b2, w3, b3):
    x = features[:, 0, :]
    x = jnp.tanh(x @ w1.T + b1)
    x = jnp.tanh(x @ w2.T + b2)
    logits = x @ w3.T + b3
    return jax.nn.softmax(logits, axis=-1)


if __name__ == "__main__":
    # Small shapes consistent with the module.
    B, S, H = 2, 8, 32
    L2N = H // 2               # int(hidden_size / 2)

    key = jax.random.PRNGKey(0)
    k_feat, k_w1, k_b1, k_w2, k_b2, k_w3, k_b3 = jax.random.split(key, 7)

    features = jax.random.normal(k_feat, (B, S, H), dtype=jnp.float32)

    # dense.weight.data.normal_(0, 0.1); other Linears use synthetic values.
    w1 = 0.1 * jax.random.normal(k_w1, (H, H), dtype=jnp.float32)
    b1 = 0.02 * jax.random.normal(k_b1, (H,), dtype=jnp.float32)
    w2 = 0.1 * jax.random.normal(k_w2, (L2N, H), dtype=jnp.float32)
    b2 = 0.02 * jax.random.normal(k_b2, (L2N,), dtype=jnp.float32)
    w3 = 0.1 * jax.random.normal(k_w3, (NUM_CLASSES, L2N), dtype=jnp.float32)
    b3 = 0.02 * jax.random.normal(k_b3, (NUM_CLASSES,), dtype=jnp.float32)

    # TODO(synk): the pretrained RoBERTa encoder and the bidirectional LSTM /
    # MLP heads it consumes internally have no clean single-Pallas-kernel
    # equivalent; `features` stands in for the encoder output.

    params = prepare_head_params(w1, b1, w2, b2, w3, b3)   # one-time prep
    prob = roberta_head_softmax(features, params)
    prob = jax.block_until_ready(prob)

    ref = reference(features, w1, b1, w2, b2, w3, b3)
    assert prob.shape == (B, NUM_CLASSES)
    # bf16 matmuls inside the kernel -> compare against f32 reference loosely.
    assert jnp.allclose(prob, ref, atol=2e-2, rtol=2e-2), (prob, ref)
    assert jnp.allclose(jnp.sum(prob, axis=-1), 1.0, atol=1e-5)

    print("KERNEL_OK")
</pallas_src>

<mosaic_0001>
module attributes {stable_mosaic.version = 11 : i64} {
  func.func @_head_softmax_kernel(%arg0: i32, %arg1: memref<2x32xbf16, #tpu.memory_space<vmem>>, %arg2: memref<32x32xbf16, #tpu.memory_space<vmem>>, %arg3: memref<1x32xf32, #tpu.memory_space<vmem>>, %arg4: memref<32x16xbf16, #tpu.memory_space<vmem>>, %arg5: memref<1x16xf32, #tpu.memory_space<vmem>>, %arg6: memref<16x1xf32, #tpu.memory_space<vmem>>, %arg7: memref<1x1xf32, #tpu.memory_space<vmem>>, %arg8: memref<2x2xf32, #tpu.memory_space<vmem>>) attributes {dimension_semantics = [#tpu.dimension_semantics<parallel>], iteration_bounds = array<i64: 1>, scalar_prefetch = 0 : i64, scratch_operands = 0 : i64, tpu.core_type = #tpu.core_type<tc>, window_params = [{transform_indices = @transform_0, window_bounds = array<i64: 2, 32>}, {pipeline_mode = #tpu.pipeline_mode<synchronous>, transform_indices = @transform_1, window_bounds = array<i64: 32, 32>}, {pipeline_mode = #tpu.pipeline_mode<synchronous>, transform_indices = @transform_2, window_bounds = array<i64: 1, 32>}, {pipeline_mode = #tpu.pipeline_mode<synchronous>, transform_indices = @transform_3, window_bounds = array<i64: 32, 16>}, {pipeline_mode = #tpu.pipeline_mode<synchronous>, transform_indices = @transform_4, window_bounds = array<i64: 1, 16>}, {pipeline_mode = #tpu.pipeline_mode<synchronous>, transform_indices = @transform_5, window_bounds = array<i64: 16, 1>}, {pipeline_mode = #tpu.pipeline_mode<synchronous>, transform_indices = @transform_6, window_bounds = array<i64: 1, 1>}, {transform_indices = @transform_7, window_bounds = array<i64: 2, 2>}]} {
    %c0 = arith.constant 0 : index
    %c0_0 = arith.constant 0 : index
    %0 = vector.load %arg1[%c0, %c0_0] : memref<2x32xbf16, #tpu.memory_space<vmem>>, vector<2x32xbf16>
    %c0_1 = arith.constant 0 : index
    %c0_2 = arith.constant 0 : index
    %1 = vector.load %arg2[%c0_1, %c0_2] : memref<32x32xbf16, #tpu.memory_space<vmem>>, vector<32x32xbf16>
    %cst = arith.constant dense<0.000000e+00> : vector<2x32xf32>
    %2 = tpu.matmul %0, %1, %cst {dimension_numbers = #tpu.dot_dimension_numbers<[1], [0], [0], [1], [0, 0, 1, 1], [], []>} : vector<2x32xbf16>, vector<32x32xbf16>, vector<2x32xf32> -> vector<2x32xf32>
    %c0_3 = arith.constant 0 : index
    %c0_4 = arith.constant 0 : index
    %3 = vector.load %arg3[%c0_3, %c0_4] : memref<1x32xf32, #tpu.memory_space<vmem>>, vector<1x32xf32>
    %4 = vector.broadcast %3 : vector<1x32xf32> to vector<2x32xf32>
    %5 = arith.addf %2, %4 : vector<2x32xf32>
    %6 = math.tanh %5 : vector<2x32xf32>
    %7 = arith.truncf %6 : vector<2x32xf32> to vector<2x32xbf16>
    %c0_5 = arith.constant 0 : index
    %c0_6 = arith.constant 0 : index
    %8 = vector.load %arg4[%c0_5, %c0_6] : memref<32x16xbf16, #tpu.memory_space<vmem>>, vector<32x16xbf16>
    %cst_7 = arith.constant dense<0.000000e+00> : vector<2x16xf32>
    %9 = tpu.matmul %7, %8, %cst_7 {dimension_numbers = #tpu.dot_dimension_numbers<[1], [0], [0], [1], [0, 0, 1, 1], [], []>} : vector<2x32xbf16>, vector<32x16xbf16>, vector<2x16xf32> -> vector<2x16xf32>
    %c0_8 = arith.constant 0 : index
    %c0_9 = arith.constant 0 : index
    %10 = vector.load %arg5[%c0_8, %c0_9] : memref<1x16xf32, #tpu.memory_space<vmem>>, vector<1x16xf32>
    %11 = vector.broadcast %10 : vector<1x16xf32> to vector<2x16xf32>
    %12 = arith.addf %9, %11 : vector<2x16xf32>
    %13 = math.tanh %12 : vector<2x16xf32>
    %c0_10 = arith.constant 0 : index
    %c0_11 = arith.constant 0 : index
    %14 = vector.load %arg6[%c0_10, %c0_11] : memref<16x1xf32, #tpu.memory_space<vmem>>, vector<16x1xf32>
    %cst_12 = arith.constant dense<0.000000e+00> : vector<2x1xf32>
    %15 = tpu.matmul %13, %14, %cst_12 {dimension_numbers = #tpu.dot_dimension_numbers<[1], [0], [0], [1], [0, 0, 1, 1], [], []>} : vector<2x16xf32>, vector<16x1xf32>, vector<2x1xf32> -> vector<2x1xf32>
    %c0_13 = arith.constant 0 : index
    %c0_14 = arith.constant 0 : index
    %16 = vector.load %arg7[%c0_13, %c0_14] : memref<1x1xf32, #tpu.memory_space<vmem>>, vector<1x1xf32>
    %17 = vector.broadcast %16 : vector<1x1xf32> to vector<2x1xf32>
    %18 = arith.addf %15, %17 : vector<2x1xf32>
    %19 = arith.negf %18 : vector<2x1xf32>
    %20 = math.exp %19 : vector<2x1xf32>
    %cst_15 = arith.constant 1.000000e+00 : f32
    %21 = vector.broadcast %cst_15 : f32 to vector<2x1xf32>
    %22 = arith.addf %21, %20 : vector<2x1xf32>
    %23 = arith.divf %21, %22 : vector<2x1xf32>
    %24 = tpu.iota {dimensions = array<i32: 1>} : vector<2x2xi32>
    %c1_i32 = arith.constant 1 : i32
    %25 = vector.broadcast %c1_i32 : i32 to vector<2x2xi32>
    %26 = arith.cmpi eq, %24, %25 : vector<2x2xi32>
    %cst_16 = arith.constant 1.000000e+00 : f32
    %27 = vector.broadcast %cst_16 : f32 to vector<2x1xf32>
    %28 = arith.subf %27, %23 : vector<2x1xf32>
    %29 = vector.shape_cast %23 : vector<2x1xf32> to vector<2x1xf32>
    %30 = vector.broadcast %29 : vector<2x1xf32> to vector<2x2xf32>
    %31 = vector.shape_cast %28 : vector<2x1xf32> to vector<2x1xf32>
    %32 = vector.broadcast %31 : vector<2x1xf32> to vector<2x2xf32>
    %33 = arith.select %26, %30, %32 : vector<2x2xi1>, vector<2x2xf32>
    %c0_17 = arith.constant 0 : index
    %c0_18 = arith.constant 0 : index
    %34 = vector.load %arg8[%c0_17, %c0_18] : memref<2x2xf32, #tpu.memory_space<vmem>>, vector<2x2xf32>
    tpu.vector_store %arg8[%c0_17, %c0_18], %33 {strides = array<i32>} : memref<2x2xf32, #tpu.memory_space<vmem>>, vector<2x2xf32>,
    return
  }
  func.func @transform_0(%arg0: i32) -> (i32, i32) {
    %c0_i32 = arith.constant 0 : i32
    %c0_i32_0 = arith.constant 0 : i32
    return %arg0, %c0_i32 : i32, i32
  }
  func.func @transform_1(%arg0: i32) -> (i32, i32) {
    %c0_i32 = arith.constant 0 : i32
    %c0_i32_0 = arith.constant 0 : i32
    %c0_i32_1 = arith.constant 0 : i32
    return %c0_i32, %c0_i32_0 : i32, i32
  }
  func.func @transform_2(%arg0: i32) -> (i32, i32) {
    %c0_i32 = arith.constant 0 : i32
    %c0_i32_0 = arith.constant 0 : i32
    %c0_i32_1 = arith.constant 0 : i32
    return %c0_i32, %c0_i32_0 : i32, i32
  }
  func.func @transform_3(%arg0: i32) -> (i32, i32) {
    %c0_i32 = arith.constant 0 : i32
    %c0_i32_0 = arith.constant 0 : i32
    %c0_i32_1 = arith.constant 0 : i32
    return %c0_i32, %c0_i32_0 : i32, i32
  }
  func.func @transform_4(%arg0: i32) -> (i32, i32) {
    %c0_i32 = arith.constant 0 : i32
    %c0_i32_0 = arith.constant 0 : i32
    %c0_i32_1 = arith.constant 0 : i32
    return %c0_i32, %c0_i32_0 : i32, i32
  }
  func.func @transform_5(%arg0: i32) -> (i32, i32) {
    %c0_i32 = arith.constant 0 : i32
    %c0_i32_0 = arith.constant 0 : i32
    %c0_i32_1 = arith.constant 0 : i32
    return %c0_i32, %c0_i32_0 : i32, i32
  }
  func.func @transform_6(%arg0: i32) -> (i32, i32) {
    %c0_i32 = arith.constant 0 : i32
    %c0_i32_0 = arith.constant 0 : i32
    %c0_i32_1 = arith.constant 0 : i32
    return %c0_i32, %c0_i32_0 : i32, i32
  }
  func.func @transform_7(%arg0: i32) -> (i32, i32) {
    %c0_i32 = arith.constant 0 : i32
    %c0_i32_0 = arith.constant 0 : i32
    return %arg0, %c0_i32 : i32, i32
  }
}

</mosaic_0001>

<llo_original>
// kernel: tpu_custom_call.1
$region0: #{tpu_custom_call.1}
  #allocation0 [shape = 'u32[]', space=smem, size = 0x4, offset = 0x4, fixed_abs, tag = 'smem constant byte address 0x4 - core index']
  #allocation1 [shape = 'u32[144,128]{1,0:T(1,128)}', space=vmem, size = 0x12000, scoped, tag = 'internal scratch']
  #allocation2 [shape = 'f32[1,1]{1,0:T(1,128)S(1)}', space=vmem, size = 0x200, scoped, tag = 'scoped memory for tpu_custom_call.1']
  %s0 = inlined_call_operand.vmem [shape: bf16[2,32], index: 0, kind: input, shape index: {}]
  %s1 = inlined_call_operand.vmem [shape: bf16[32,32], index: 1, kind: input, shape index: {}]
  %s2 = inlined_call_operand.vmem [shape: f32[1,32], index: 2, kind: input, shape index: {}]
  %s3 = inlined_call_operand.vmem [shape: bf16[32,16], index: 3, kind: input, shape index: {}]
  %s4 = inlined_call_operand.vmem [shape: f32[1,16], index: 4, kind: input, shape index: {}]
  %s5 = inlined_call_operand.vmem [shape: f32[16,1], index: 5, kind: input, shape index: {}]
  %s6 = inlined_call_operand.<no memory space> [shape: f32[1,1], index: 6, kind: input, shape index: {}]
  %s7 = inlined_call_operand.hbm [shape: f32[2,2], index: 7, kind: output, shape index: {}]
  %s8 = sld [smem:[#allocation0]]
  $region38: #{tpu_custom_call.1} parent=0
    _
  %s10 = ssub.s32 1, %s8
  %s11 = scalar_select 0, %s10, %s8
  %v12 = vstv %s6
  %13 = vst [vmem:[#allocation2] sm:$0x1] %v12
  $region1: #{tpu_custom_call.1} parent=0
    #allocation3 [shape = 'u8[1024]{0}', space=vmem, size = 0x400, scoped, tag = 'output window, operand 0, single buffered']
    #allocation4 [shape = 's32[1]{0}', space=sflag, size = 0x4, scoped, tag = 'scoped memory for tpu_custom_call.1']
    %14 = vsyncpa [#allocation4], 0
    // Predicated region
    $region2: #{tpu_custom_call.1} parent=1 // pred_check
      _
    $region3: #{tpu_custom_call.1} parent=1 // pred_check_branch
      %16 = sbr.rel (0) target = $region5
    $region4: #{tpu_custom_call.1} parent=1 // pred_region
      _
    $region5: #{tpu_custom_call.1} parent=1 // pred_fallthru
      _
    // Predicated region
    $region6: #{tpu_custom_call.1} parent=1 // pred_check
      _
    $region7: #{tpu_custom_call.1} parent=1 // pred_check_branch
      %18 = sbr.rel (0) target = $region9
    $region8: #{tpu_custom_call.1} parent=1 // pred_region
      _
    $region9: #{tpu_custom_call.1} parent=1 // pred_fallthru
      _
    // Predicated region
    $region10: #{tpu_custom_call.1} parent=1 // pred_check
      _
    $region11: #{tpu_custom_call.1} parent=1 // pred_check_branch
      %20 = sbr.rel (0) target = $region13
    $region12: #{tpu_custom_call.1} parent=1 // pred_region
      _
    $region13: #{tpu_custom_call.1} parent=1 // pred_fallthru
      _
    // Predicated region
    $region14: #{tpu_custom_call.1} parent=1 // pred_check
      _
    $region15: #{tpu_custom_call.1} parent=1 // pred_check_branch
      %22 = sbr.rel (0) target = $region17
    $region16: #{tpu_custom_call.1} parent=1 // pred_region
      _
    $region17: #{tpu_custom_call.1} parent=1 // pred_fallthru
      _
    // Predicated region
    $region18: #{tpu_custom_call.1} parent=1 // pred_check
      _
    $region19: #{tpu_custom_call.1} parent=1 // pred_check_branch
      %24 = sbr.rel (0) target = $region21
    $region20: #{tpu_custom_call.1} parent=1 // pred_region
      _
    $region21: #{tpu_custom_call.1} parent=1 // pred_fallthru
      _
    // Predicated region
    $region22: #{tpu_custom_call.1} parent=1 // pred_check
      _
    $region23: #{tpu_custom_call.1} parent=1 // pred_check_branch
      %26 = sbr.rel (0) target = $region25
    $region24: #{tpu_custom_call.1} parent=1 // pred_region
      _
    $region25: #{tpu_custom_call.1} parent=1 // pred_fallthru
      _
    // Predicated region
    $region26: #{tpu_custom_call.1} parent=1 // pred_check
      _
    $region27: #{tpu_custom_call.1} parent=1 // pred_check_branch
      %28 = sbr.rel (0) target = $region29
    $region28: #{tpu_custom_call.1} parent=1 // pred_region
      _
    $region29: #{tpu_custom_call.1} parent=1 // pred_fallthru
      _
    %v30 = vld [vmem:[%s0] sm:$0x1]
    %v31 = vld [vmem:[%s1] sm:$0xf]
    %v32 = vld [vmem:[%s1 + $0x4] sm:$0xf]
    %v33 = vld [vmem:[%s1 + $0x8] sm:$0xf]
    %v34 = vld [vmem:[%s1 + $0xc] sm:$0xf]
    %v35 = vld [vmem:[%s2] sm:$0x1]
    %v37 = vlaneseq
    %v38 = vshrl.u32 %v37, 7
    %v39 = vsub.s32 0, %v38
    %v40 = vrot.slane %v35, %v39
    %v46 = vunpack.c.l.b16 %v31
    %v47 = vunpack.c.l.b16 %v32
    %v48 = vunpack.c.l.b16 %v33
    %v49 = vunpack.c.l.b16 %v34
    %v50 = vpack.c.b16 %v47, %v46
    %v51 = vpack.c.b16 %v49, %v48
    %vm54 = vcmask 261120
    %v56 = vsel %vm54, %v30, 0
    %58 = vmatprep.subr.bf16.mxu0 0
    %59 = vmatpush1.bf16.msra.mxu0 0
    %60 = vmatprep.subr.bf16.mxu0 0
    %61 = vmatpush1.bf16.msra.mxu0 0
    %62 = vmatprep.subr.bf16.mxu0 0
    %63 = vmatpush1.bf16.msra.mxu0 0
    %64 = vmatprep.subr.bf16.mxu0 0
    %65 = vmatpush1.bf16.msra.mxu0 0
    %66 = vmatprep.subr.bf16.mxu0 0
    %67 = vmatpush1.bf16.msra.mxu0 0
    %68 = vmatprep.subr.bf16.mxu0 0
    %69 = vmatpush1.bf16.msra.mxu0 0
    %70 = vmatprep.subr.bf16.mxu0 0
    %71 = vmatpush1.bf16.msra.mxu0 %v51
    %72 = vmatprep.subr.bf16.mxu0 0
    %73 = vmatpush1.bf16.msra.mxu0 %v50
    %74 = vmatprep.subr.bf16.mxu0 0
    %75 = vmatpush2.bf16.msra.mxu0 0
    %76 = vmatprep.subr.bf16.mxu0 0
    %77 = vmatpush2.bf16.msra.mxu0 0
    %78 = vmatprep.subr.bf16.mxu0 0
    %79 = vmatpush2.bf16.msra.mxu0 0
    %80 = vmatprep.subr.bf16.mxu0 0
    %81 = vmatpush2.bf16.msra.mxu0 0
    %82 = vmatprep.subr.bf16.mxu0 0
    %83 = vmatpush2.bf16.msra.mxu0 0
    %84 = vmatprep.subr.bf16.mxu0 0
    %85 = vmatpush2.bf16.msra.mxu0 0
    %86 = vmatprep.subr.bf16.mxu0 0
    %87 = vmatpush2.bf16.msra.mxu0 0
    %88 = vmatprep.subr.bf16.mxu0 0
    %89 = vmatpush2.bf16.msra.mxu0 0
    %90 = vmatprep.mubr.bf16.mxu0 0
    %91 = vmatmul.mubr.bf16.gmra.mxu0 %v56
    %v92 = vpop.f32.mrf.mxu0
    %v93 = vadd.f32 %v40, %v92
    %v94 = vpop.f32.mrf.mxu0
    %v95 = vpop.f32.mrf.mxu0
    %v96 = vpop.f32.mrf.mxu0
    %97 = vdwg.mxu0
    %v98 = vtanh.pop %v93
    %v99 = vpack.c.bf16 %v98, %v98
    %v100 = vld [vmem:[%s3] sm:$0xf]
    %v101 = vld [vmem:[%s3 + $0x4] sm:$0xf]
    %v102 = vld [vmem:[%s3 + $0x8] sm:$0xf]
    %v103 = vld [vmem:[%s3 + $0xc] sm:$0xf]
    %v104 = vld [vmem:[%s4] sm:$0x1]
    %v106 = vlaneseq
    %v107 = vshrl.u32 %v106, 7
    %v108 = vsub.s32 0, %v107
    %v109 = vrot.slane %v104, %v108
    %v115 = vunpack.c.l.b16 %v100
    %v116 = vunpack.c.l.b16 %v101
    %v117 = vunpack.c.l.b16 %v102
    %v118 = vunpack.c.l.b16 %v103
    %v119 = vpack.c.b16 %v116, %v115
    %v120 = vpack.c.b16 %v118, %v117
    %v124 = vsel %vm54, %v99, 0
    %126 = vmatprep.subr.bf16.mxu0 0
    %127 = vmatpush1.bf16.msra.mxu0 0
    %128 = vmatprep.subr.bf16.mxu0 0
    %129 = vmatpush1.bf16.msra.mxu0 0
    %130 = vmatprep.subr.bf16.mxu0 0
    %131 = vmatpush1.bf16.msra.mxu0 0
    %132 = vmatprep.subr.bf16.mxu0 0
    %133 = vmatpush1.bf16.msra.mxu0 0
    %134 = vmatprep.subr.bf16.mxu0 0
    %135 = vmatpush1.bf16.msra.mxu0 0
    %136 = vmatprep.subr.bf16.mxu0 0
    %137 = vmatpush1.bf16.msra.mxu0 0
    %138 = vmatprep.subr.bf16.mxu0 0
    %139 = vmatpush1.bf16.msra.mxu0 %v120
    %140 = vmatprep.subr.bf16.mxu0 0
    %141 = vmatpush1.bf16.msra.mxu0 %v119
    %142 = vmatprep.subr.bf16.mxu0 0
    %143 = vmatpush2.bf16.msra.mxu0 0
    %144 = vmatprep.subr.bf16.mxu0 0
    %145 = vmatpush2.bf16.msra.mxu0 0
    %146 = vmatprep.subr.bf16.mxu0 0
    %147 = vmatpush2.bf16.msra.mxu0 0
    %148 = vmatprep.subr.bf16.mxu0 0
    %149 = vmatpush2.bf16.msra.mxu0 0
    %150 = vmatprep.subr.bf16.mxu0 0
    %151 = vmatpush2.bf16.msra.mxu0 0
    %152 = vmatprep.subr.bf16.mxu0 0
    %153 = vmatpush2.bf16.msra.mxu0 0
    %154 = vmatprep.subr.bf16.mxu0 0
    %155 = vmatpush2.bf16.msra.mxu0 0
    %156 = vmatprep.subr.bf16.mxu0 0
    %157 = vmatpush2.bf16.msra.mxu0 0
    %158 = vmatprep.mubr.bf16.mxu0 0
    %159 = vmatmul.mubr.bf16.gmra.mxu0 %v124
    %v160 = vpop.f32.mrf.mxu0
    %v161 = vadd.f32 %v109, %v160
    %v162 = vpop.f32.mrf.mxu0
    %v163 = vpop.f32.mrf.mxu0
    %v164 = vpop.f32.mrf.mxu0
    %165 = vdwg.mxu0
    %v166 = vtanh.pop %v161
    %v167 = vld [vmem:[%s5] sm:$0xff]
    %v168 = vld [vmem:[%s5 + $0x8] sm:$0xff]
    %v169 = vld [vmem:[#allocation2] sm:$0x1]
    %v171 = vlaneseq
    %v172 = vshrl.u32 %v171, 7
    %v173 = vsub.s32 0, %v172
    %v174 = vrot.slane %v169, %v173
    %vm176 = vcmask 130048
    %v178 = vsel %vm176, %v166, 0
    %180 = vmatprep.subr.mxu0 0.0
    %181 = vmatpush1.msra.mxu0 0.0
    %182 = vmatprep.subr.mxu0 0.0
    %183 = vmatpush1.msra.mxu0 0.0
    %184 = vmatprep.subr.mxu0 0.0
    %185 = vmatpush1.msra.mxu0 0.0
    %186 = vmatprep.subr.mxu0 0.0
    %187 = vmatpush1.msra.mxu0 0.0
    %188 = vmatprep.subr.mxu0 0.0
    %189 = vmatpush1.msra.mxu0 0.0
    %190 = vmatprep.subr.mxu0 0.0
    %191 = vmatpush1.msra.mxu0 0.0
    %192 = vmatprep.subr.mxu0 0.0
    %193 = vmatpush1.msra.mxu0 0.0
    %194 = vmatprep.subr.mxu0 0.0
    %195 = vmatpush1.msra.mxu0 0.0
    %196 = vmatprep.subr.mxu0 0.0
    %197 = vmatpush1.msra.mxu0 0.0
    %198 = vmatprep.subr.mxu0 0.0
    %199 = vmatpush1.msra.mxu0 0.0
    %200 = vmatprep.subr.mxu0 0.0
    %201 = vmatpush1.msra.mxu0 0.0
    %202 = vmatprep.subr.mxu0 0.0
    %203 = vmatpush1.msra.mxu0 0.0
    %204 = vmatprep.subr.mxu0 0.0
    %205 = vmatpush1.msra.mxu0 0.0
    %206 = vmatprep.subr.mxu0 0.0
    %207 = vmatpush1.msra.mxu0 0.0
    %208 = vmatprep.subr.mxu0 0.0
    %209 = vmatpush1.msra.mxu0 %v168
    %210 = vmatprep.subr.mxu0 0.0
    %211 = vmatpush1.msra.mxu0 %v167
    %212 = vmatprep.subr.mxu0 0.0
    %213 = vmatpush2.msra.mxu0 0.0
    %214 = vmatprep.subr.mxu0 0.0
    %215 = vmatpush2.msra.mxu0 0.0
    %216 = vmatprep.subr.mxu0 0.0
    %217 = vmatpush2.msra.mxu0 0.0
    %218 = vmatprep.subr.mxu0 0.0
    %219 = vmatpush2.msra.mxu0 0.0
    %220 = vmatprep.subr.mxu0 0.0
    %221 = vmatpush2.msra.mxu0 0.0
    %222 = vmatprep.subr.mxu0 0.0
    %223 = vmatpush2.msra.mxu0 0.0
    %224 = vmatprep.subr.mxu0 0.0
    %225 = vmatpush2.msra.mxu0 0.0
    %226 = vmatprep.subr.mxu0 0.0
    %227 = vmatpush2.msra.mxu0 0.0
    %228 = vmatprep.subr.mxu0 0.0
    %229 = vmatpush2.msra.mxu0 0.0
    %230 = vmatprep.subr.mxu0 0.0
    %231 = vmatpush2.msra.mxu0 0.0
    %232 = vmatprep.subr.mxu0 0.0
    %233 = vmatpush2.msra.mxu0 0.0
    %234 = vmatprep.subr.mxu0 0.0
    %235 = vmatpush2.msra.mxu0 0.0
    %236 = vmatprep.subr.mxu0 0.0
    %237 = vmatpush2.msra.mxu0 0.0
    %238 = vmatprep.subr.mxu0 0.0
    %239 = vmatpush2.msra.mxu0 0.0
    %240 = vmatprep.subr.mxu0 0.0
    %241 = vmatpush2.msra.mxu0 0.0
    %242 = vmatprep.subr.mxu0 0.0
    %243 = vmatpush2.msra.mxu0 0.0
    %244 = vmatprep.mubr.f32.mxu0 0.0
    %245 = vmatmul.mubr.f32.gmra.mxu0 %v178
    %v246 = vpop.f32.mrf.mxu0
    %v247 = vadd.f32 %v174, %v246
    %v248 = vpop.f32.mrf.mxu0
    %249 = vdwg.mxu0
    %v250 = vxor.u32 %v247, 2147483648
    %v251 = vmul.f32 %v250, 1.442695
    %v252 = vpow.pop %v251
    %v253 = vadd.f32 %v252, 1.0
    %v254 = vrcp.pop %v253
    %v255 = vmul.f32 1.0, %v254
    %v256 = vlaneseq
    %v257 = vand.u32 %v256, 127
    %vm258 = vcmp.eq.s32.totalorder %v257, 1
    %v259 = vsub.f32 1.0, %v255
    %261 = vset.pattern.permute.xlu0 0
    %262 = vperm.xlu0 %261, %v255
    %v263 = vpop.permute.xlu0 %262
    %266 = vset.pattern.permute.xlu0 0
    %267 = vperm.xlu0 %266, %v259
    %v268 = vpop.permute.xlu0 %267
    %v270 = vsel %vm258, %v263, %v268
    %vm271 = vcmask 9216
    %272 = vst.msk [vmem:[#allocation3] sm:$0x3] %vm271, %v270
    // Predicated region
    $region30: #{tpu_custom_call.1} parent=1 // pred_check
      _
    $region31: #{tpu_custom_call.1} parent=1 // pred_check_branch
      %274 = sbr.rel (0) target = $region33
    $region32: #{tpu_custom_call.1} parent=1 // pred_region
      %s276 = ssub.s32 32, 32
      %277 = vsyncadd [#allocation4], %s276
      %s279 = sshll.u32 [#allocation3], 4
      %s280 = int_to_ptr.vmem [resolvable:$true] %s279
      %282 = dma.vmem_to_hbm [thread:$0]  %s280, 32, %s7, [#allocation4]
    $region33: #{tpu_custom_call.1} parent=1 // pred_fallthru
      _
    // Predicated region
    $region34: #{tpu_custom_call.1} parent=1 // pred_check
      _
    $region35: #{tpu_custom_call.1} parent=1 // pred_check_branch
      %284 = sbr.rel (0) target = $region37
    $region36: #{tpu_custom_call.1} parent=1 // pred_region
      %285 = dma.done [#allocation4], 32
    $region37: #{tpu_custom_call.1} parent=1 // pred_fallthru
      _
    %286 = vsyncpa [#allocation4], 1

</llo_original>
